<compile_context>
chip_gen: v7x
topology: tpu7x:2x2x1
jax: 0.10.0
libtpu: 0.0.40
codegen_flags: <defaults>
</compile_context>

<pallas_src>
import jax
import jax.numpy as jnp
from jax.experimental import pallas as pl
from jax.experimental.pallas import tpu as pltpu


def _gab_kernel_clast(x_ref, w1_ref, b1_ref, w2t_ref, b2_ref, o_ref):
    """Channels-last block: x (1, HW, C) — spatial on sublanes, C dense on lanes."""
    # Squeeze: global average pool over the sublane (spatial) axis -> (1, C).
    pooled = jnp.mean(x_ref[0].astype(jnp.float32), axis=0, keepdims=True)

    # Excite on the VPU/XLU (MXU would waste a full pass on 1-column matvecs).
    # z1[r] = relu(sum_c w1[r, c] * pooled[c] + b1[r])        -> (Cr, 1)
    z1 = jnp.sum(w1_ref[...] * pooled, axis=1, keepdims=True) + b1_ref[...]
    z1 = jnp.maximum(z1, 0.0)
    # z2[c] = sigmoid(sum_r w2[c, r] * z1[r] + b2[c])  (w2t = w2.T) -> (1, C)
    z2 = jnp.sum(w2t_ref[...] * z1, axis=0, keepdims=True) + b2_ref[...]
    z2 = jax.nn.sigmoid(z2)

    # Rescale: re-read x from VMEM (keeps no f32 slab live across the excite);
    # (1, C) row broadcasts over the HW sublanes -> lane-dense full-width stores.
    o_ref[0] = (x_ref[0].astype(jnp.float32) * z2).astype(o_ref.dtype)


def _gab_kernel_cfirst(x_ref, w1t_ref, b1_ref, w2_ref, b2_ref, o_ref):
    """Channels-first block: x (1, C, HW) — C on sublanes, 128-aligned HW on lanes."""
    # Squeeze: global average pool over the lane (spatial) axis -> (C, 1).
    pooled = jnp.mean(x_ref[0].astype(jnp.float32), axis=1, keepdims=True)

    # Excite on the VPU/XLU.  w1t = w1.T with shape (C, Cr):
    # z1[r] = relu(sum_c w1[r, c] * pooled[c] + b1[r])        -> (1, Cr)
    z1 = jnp.sum(w1t_ref[...] * pooled, axis=0, keepdims=True) + b1_ref[...]
    z1 = jnp.maximum(z1, 0.0)
    # z2[c] = sigmoid(sum_r w2[c, r] * z1[r] + b2[c])         -> (C, 1)
    z2 = jnp.sum(w2_ref[...] * z1, axis=1, keepdims=True) + b2_ref[...]
    z2 = jax.nn.sigmoid(z2)

    # Rescale: (C, 1) column broadcasts over the lane-aligned spatial axis.
    o_ref[0] = (x_ref[0].astype(jnp.float32) * z2).astype(o_ref.dtype)


def gab_forward(x, w1, b1, w2, b2):
    """x: (N, C, H, W).  w1: (Cr, C), b1: (Cr,), w2: (C, Cr), b2: (C,)."""
    N, C, H, W = x.shape
    Cr = w1.shape[0]
    HW = H * W
    dtype_bytes = jnp.dtype(x.dtype).itemsize

    # Layout choice: keep C on the lane axis unless HW is already 128-aligned
    # and C is not (toy / small-C shapes) — avoids masked vst.msk lane tails.
    channels_last = not (HW % 128 == 0 and C % 128 != 0)

    # VMEM footprint: BlockSpec double-buffers both the input and output slab
    # (4 buffers) plus the tiny (f32) weight tiles.
    block_bytes = C * HW * dtype_bytes
    weight_bytes = (2 * Cr * C + Cr + C) * 4
    vmem_needed = 4 * block_bytes + 2 * weight_bytes + (1 << 20)
    vmem_limit = int(min(max(vmem_needed, 32 << 20), 128 << 20))
    # TODO(synk): if 4*block_bytes exceeds ~64 MiB (v7x physical VMEM), switch
    # to a two-pass grid over HW tiles (pool pass, then rescale pass).

    cost = pl.CostEstimate(
        flops=N * (4 * C * Cr + 2 * C * HW),
        transcendentals=N * C,
        bytes_accessed=2 * N * C * HW * dtype_bytes,
    )
    cparams = pltpu.CompilerParams(
        dimension_semantics=("parallel",),
        vmem_limit_bytes=vmem_limit,
    )

    if channels_last:
        x2 = jnp.transpose(x, (0, 2, 3, 1)).reshape(N, HW, C)
        out = pl.pallas_call(
            _gab_kernel_clast,
            out_shape=jax.ShapeDtypeStruct((N, HW, C), x.dtype),
            grid_spec=pltpu.PrefetchScalarGridSpec(
                num_scalar_prefetch=0,
                grid=(N,),
                in_specs=[
                    pl.BlockSpec((1, HW, C), lambda i: (i, 0, 0)),   # x
                    pl.BlockSpec((Cr, C), lambda i: (0, 0)),         # w1
                    pl.BlockSpec((Cr, 1), lambda i: (0, 0)),         # b1
                    pl.BlockSpec((Cr, C), lambda i: (0, 0)),         # w2.T
                    pl.BlockSpec((1, C), lambda i: (0, 0)),          # b2
                ],
                out_specs=pl.BlockSpec((1, HW, C), lambda i: (i, 0, 0)),
            ),
            compiler_params=cparams,
            cost_estimate=cost,
        )(
            x2,
            w1.astype(jnp.float32),
            b1.reshape(Cr, 1).astype(jnp.float32),
            w2.T.astype(jnp.float32),
            b2.reshape(1, C).astype(jnp.float32),
        )
        return jnp.transpose(out.reshape(N, H, W, C), (0, 3, 1, 2))
    else:
        x2 = x.reshape(N, C, HW)
        out = pl.pallas_call(
            _gab_kernel_cfirst,
            out_shape=jax.ShapeDtypeStruct((N, C, HW), x.dtype),
            grid_spec=pltpu.PrefetchScalarGridSpec(
                num_scalar_prefetch=0,
                grid=(N,),
                in_specs=[
                    pl.BlockSpec((1, C, HW), lambda i: (i, 0, 0)),   # x
                    pl.BlockSpec((C, Cr), lambda i: (0, 0)),         # w1.T
                    pl.BlockSpec((1, Cr), lambda i: (0, 0)),         # b1
                    pl.BlockSpec((C, Cr), lambda i: (0, 0)),         # w2
                    pl.BlockSpec((C, 1), lambda i: (0, 0)),          # b2
                ],
                out_specs=pl.BlockSpec((1, C, HW), lambda i: (i, 0, 0)),
            ),
            compiler_params=cparams,
            cost_estimate=cost,
        )(
            x2,
            w1.T.astype(jnp.float32),
            b1.reshape(1, Cr).astype(jnp.float32),
            w2.astype(jnp.float32),
            b2.reshape(C, 1).astype(jnp.float32),
        )
        return out.reshape(N, C, H, W)


def gab_reference(x, w1, b1, w2, b2):
    pooled = jnp.mean(x, axis=(2, 3))                        # (N, C)
    z1 = jnp.maximum(pooled @ w1.T + b1, 0.0)                # (N, Cr)
    z2 = jax.nn.sigmoid(z1 @ w2.T + b2)                      # (N, C)
    return x * z2[:, :, None, None]


def _run_case(key, N, C, H, W, reduction):
    Cr = C // reduction
    kx, kw1, kb1, kw2, kb2 = jax.random.split(key, 5)
    x = jax.random.normal(kx, (N, C, H, W), dtype=jnp.float32)
    w1 = jax.random.normal(kw1, (Cr, C), dtype=jnp.float32) * 0.1
    b1 = jax.random.normal(kb1, (Cr,), dtype=jnp.float32) * 0.1
    w2 = jax.random.normal(kw2, (C, Cr), dtype=jnp.float32) * 0.1
    b2 = jax.random.normal(kb2, (C,), dtype=jnp.float32) * 0.1

    out = jax.block_until_ready(gab_forward(x, w1, b1, w2, b2))
    ref = gab_reference(x, w1, b1, w2, b2)
    assert out.shape == (N, C, H, W)
    assert jnp.max(jnp.abs(out - ref)) < 1e-4, float(jnp.max(jnp.abs(out - ref)))


if __name__ == "__main__":
    key = jax.random.PRNGKey(0)
    k1, k2 = jax.random.split(key)

    # Toy shape (HW 128-aligned, tiny C) -> channels-first path.
    _run_case(k1, N=2, C=8, H=16, W=16, reduction=4)
    # SE-like shape (C 128-aligned, ragged HW=49) -> lane-dense channels-last path.
    _run_case(k2, N=2, C=128, H=7, W=7, reduction=4)

    print("KERNEL_OK")
</pallas_src>

<mosaic_0001>
module attributes {stable_mosaic.version = 11 : i64} {
  func.func @_gab_kernel_cfirst(%arg0: i32, %arg1: memref<1x8x256xf32, #tpu.memory_space<vmem>>, %arg2: memref<8x2xf32, #tpu.memory_space<vmem>>, %arg3: memref<1x2xf32, #tpu.memory_space<vmem>>, %arg4: memref<8x2xf32, #tpu.memory_space<vmem>>, %arg5: memref<8x1xf32, #tpu.memory_space<vmem>>, %arg6: memref<1x8x256xf32, #tpu.memory_space<vmem>>) attributes {dimension_semantics = [#tpu.dimension_semantics<parallel>], iteration_bounds = array<i64: 2>, scalar_prefetch = 0 : i64, scratch_operands = 0 : i64, tpu.core_type = #tpu.core_type<tc>, window_params = [{transform_indices = @transform_0, window_bounds = array<i64: 1, 8, 256>}, {pipeline_mode = #tpu.pipeline_mode<synchronous>, transform_indices = @transform_1, window_bounds = array<i64: 8, 2>}, {pipeline_mode = #tpu.pipeline_mode<synchronous>, transform_indices = @transform_2, window_bounds = array<i64: 1, 2>}, {pipeline_mode = #tpu.pipeline_mode<synchronous>, transform_indices = @transform_3, window_bounds = array<i64: 8, 2>}, {pipeline_mode = #tpu.pipeline_mode<synchronous>, transform_indices = @transform_4, window_bounds = array<i64: 8, 1>}, {transform_indices = @transform_5, window_bounds = array<i64: 1, 8, 256>}]} {
    %c0 = arith.constant 0 : index
    %c0_0 = arith.constant 0 : index
    %c0_1 = arith.constant 0 : index
    %0 = vector.load %arg1[%c0, %c0_0, %c0_1] : memref<1x8x256xf32, #tpu.memory_space<vmem>>, vector<1x8x256xf32>
    %1 = vector.shape_cast %0 : vector<1x8x256xf32> to vector<8x256xf32>
    %cst = arith.constant dense<0.000000e+00> : vector<8xf32>
    %2 = vector.multi_reduction <add>, %1, %cst [1] : vector<8x256xf32> to vector<8xf32>
    %3 = vector.shape_cast %2 : vector<8xf32> to vector<8x1xf32>
    %cst_2 = arith.constant 2.560000e+02 : f32
    %4 = vector.broadcast %cst_2 : f32 to vector<8x1xf32>
    %5 = arith.divf %3, %4 : vector<8x1xf32>
    %c0_3 = arith.constant 0 : index
    %c0_4 = arith.constant 0 : index
    %6 = vector.load %arg2[%c0_3, %c0_4] : memref<8x2xf32, #tpu.memory_space<vmem>>, vector<8x2xf32>
    %7 = vector.broadcast %5 : vector<8x1xf32> to vector<8x2xf32>
    %8 = arith.mulf %6, %7 : vector<8x2xf32>
    %cst_5 = arith.constant dense<0.000000e+00> : vector<2xf32>
    %9 = vector.multi_reduction <add>, %8, %cst_5 [0] : vector<8x2xf32> to vector<2xf32>
    %10 = vector.shape_cast %9 : vector<2xf32> to vector<1x2xf32>
    %c0_6 = arith.constant 0 : index
    %c0_7 = arith.constant 0 : index
    %11 = vector.load %arg3[%c0_6, %c0_7] : memref<1x2xf32, #tpu.memory_space<vmem>>, vector<1x2xf32>
    %12 = arith.addf %10, %11 : vector<1x2xf32>
    %cst_8 = arith.constant 0.000000e+00 : f32
    %13 = vector.broadcast %cst_8 : f32 to vector<1x2xf32>
    %14 = arith.maximumf %12, %13 : vector<1x2xf32>
    %c0_9 = arith.constant 0 : index
    %c0_10 = arith.constant 0 : index
    %15 = vector.load %arg4[%c0_9, %c0_10] : memref<8x2xf32, #tpu.memory_space<vmem>>, vector<8x2xf32>
    %16 = vector.broadcast %14 : vector<1x2xf32> to vector<8x2xf32>
    %17 = arith.mulf %15, %16 : vector<8x2xf32>
    %cst_11 = arith.constant dense<0.000000e+00> : vector<8xf32>
    %18 = vector.multi_reduction <add>, %17, %cst_11 [1] : vector<8x2xf32> to vector<8xf32>
    %19 = vector.shape_cast %18 : vector<8xf32> to vector<8x1xf32>
    %c0_12 = arith.constant 0 : index
    %c0_13 = arith.constant 0 : index
    %20 = vector.load %arg5[%c0_12, %c0_13] : memref<8x1xf32, #tpu.memory_space<vmem>>, vector<8x1xf32>
    %21 = arith.addf %19, %20 : vector<8x1xf32>
    %22 = arith.negf %21 : vector<8x1xf32>
    %23 = math.exp %22 : vector<8x1xf32>
    %cst_14 = arith.constant 1.000000e+00 : f32
    %24 = vector.broadcast %cst_14 : f32 to vector<8x1xf32>
    %25 = arith.addf %24, %23 : vector<8x1xf32>
    %26 = arith.divf %24, %25 : vector<8x1xf32>
    %c0_15 = arith.constant 0 : index
    %c0_16 = arith.constant 0 : index
    %c0_17 = arith.constant 0 : index
    %27 = vector.load %arg1[%c0_15, %c0_16, %c0_17] : memref<1x8x256xf32, #tpu.memory_space<vmem>>, vector<1x8x256xf32>
    %28 = vector.shape_cast %27 : vector<1x8x256xf32> to vector<8x256xf32>
    %29 = vector.broadcast %26 : vector<8x1xf32> to vector<8x256xf32>
    %30 = arith.mulf %28, %29 : vector<8x256xf32>
    %c0_18 = arith.constant 0 : index
    %c0_19 = arith.constant 0 : index
    %c0_20 = arith.constant 0 : index
    %31 = vector.load %arg6[%c0_18, %c0_19, %c0_20] : memref<1x8x256xf32, #tpu.memory_space<vmem>>, vector<1x8x256xf32>
    %32 = vector.shape_cast %31 : vector<1x8x256xf32> to vector<8x256xf32>
    %33 = vector.shape_cast %30 : vector<8x256xf32> to vector<1x8x256xf32>
    tpu.vector_store %arg6[%c0_18, %c0_19, %c0_20], %33 {strides = array<i32>} : memref<1x8x256xf32, #tpu.memory_space<vmem>>, vector<1x8x256xf32>,
    return
  }
  func.func @transform_0(%arg0: i32) -> (i32, i32, i32) {
    %c0_i32 = arith.constant 0 : i32
    %c0_i32_0 = arith.constant 0 : i32
    %c0_i32_1 = arith.constant 0 : i32
    return %arg0, %c0_i32, %c0_i32_0 : i32, i32, i32
  }
  func.func @transform_1(%arg0: i32) -> (i32, i32) {
    %c0_i32 = arith.constant 0 : i32
    %c0_i32_0 = arith.constant 0 : i32
    %c0_i32_1 = arith.constant 0 : i32
    return %c0_i32, %c0_i32_0 : i32, i32
  }
  func.func @transform_2(%arg0: i32) -> (i32, i32) {
    %c0_i32 = arith.constant 0 : i32
    %c0_i32_0 = arith.constant 0 : i32
    %c0_i32_1 = arith.constant 0 : i32
    return %c0_i32, %c0_i32_0 : i32, i32
  }
  func.func @transform_3(%arg0: i32) -> (i32, i32) {
    %c0_i32 = arith.constant 0 : i32
    %c0_i32_0 = arith.constant 0 : i32
    %c0_i32_1 = arith.constant 0 : i32
    return %c0_i32, %c0_i32_0 : i32, i32
  }
  func.func @transform_4(%arg0: i32) -> (i32, i32) {
    %c0_i32 = arith.constant 0 : i32
    %c0_i32_0 = arith.constant 0 : i32
    %c0_i32_1 = arith.constant 0 : i32
    return %c0_i32, %c0_i32_0 : i32, i32
  }
  func.func @transform_5(%arg0: i32) -> (i32, i32, i32) {
    %c0_i32 = arith.constant 0 : i32
    %c0_i32_0 = arith.constant 0 : i32
    %c0_i32_1 = arith.constant 0 : i32
    return %arg0, %c0_i32, %c0_i32_0 : i32, i32, i32
  }
}

</mosaic_0001>

<llo_original>
// kernel: tpu_custom_call.1
$region0: #{tpu_custom_call.1}
  #allocation0 [shape = 'u32[]', space=smem, size = 0x4, offset = 0x4, fixed_abs, tag = 'smem constant byte address 0x4 - core index']
  #allocation1 [shape = 'u32[144,128]{1,0:T(1,128)}', space=vmem, size = 0x12000, scoped, tag = 'internal scratch']
  %s0 = inlined_call_operand.hbm [shape: f32[2,8,256], index: 0, kind: input, shape index: {}]
  %s1 = inlined_call_operand.vmem [shape: f32[8,2], index: 1, kind: input, shape index: {}]
  %s2 = inlined_call_operand.vmem [shape: f32[1,2], index: 2, kind: input, shape index: {}]
  %s3 = inlined_call_operand.vmem [shape: f32[8,2], index: 3, kind: input, shape index: {}]
  %s4 = inlined_call_operand.vmem [shape: f32[8,1], index: 4, kind: input, shape index: {}]
  %s5 = inlined_call_operand.hbm [shape: f32[2,8,256], index: 5, kind: output, shape index: {}]
  %s6 = sld [smem:[#allocation0]]
  $region57: #{tpu_custom_call.1} parent=0
    _
  %s8 = ssub.s32 1, %s6
  %s9 = scalar_select 0, %s8, %s6
  $region1: #{tpu_custom_call.1} parent=0
    #allocation2 [shape = 'u8[16384]{0}', space=vmem, size = 0x4000, scoped, tag = 'input window, operand 0']
    #allocation3 [shape = 's32[2]{0}', space=sflag, size = 0x8, scoped, tag = 'scoped memory for tpu_custom_call.1']
    #allocation4 [shape = 's32[2]{0}', space=sflag, size = 0x8, scoped, tag = 'scoped memory for tpu_custom_call.1']
    #allocation5 [shape = 'u8[16384]{0}', space=vmem, size = 0x4000, scoped, tag = 'output window, operand 0']
    %10 = vsyncpa [#allocation3], 0
    %s11 = scalar_lea.sflag [#allocation3], 1
    %12 = vsyncpa %s11, 0
    %13 = vsyncpa [#allocation4], 0
    %s14 = scalar_lea.sflag [#allocation4], 1
    %15 = vsyncpa %s14, 0
    loop: start=0, step=1, limit=4
    $region2: #{tpu_custom_call.1} parent=1 // loop_pre_header
      _
    $region3: #{tpu_custom_call.1} parent=1 // loop_header
      %s17 = sphi 0, %s21
      %p18 = scmp.ge.s32.totalorder %s17, 4
      %s27 = sphi 0, %s29
      %s30 = sphi 0, %s27
      %s31 = sphi 0, %s30
      %s47 = sphi 0, %s31
      %s51 = sphi 0, %s51
      %s53 = sphi 0, %s51
      %s54 = sphi 0, %s53
      %s68 = sphi 0, %s54
      %s72 = sphi 0, %s72
      %s74 = sphi 0, %s72
      %s75 = sphi 0, %s74
      %s89 = sphi 0, %s75
      %s93 = sphi 0, %s93
      %s95 = sphi 0, %s93
      %s96 = sphi 0, %s95
      %s110 = sphi 0, %s96
      %s114 = sphi 0, %s114
      %s116 = sphi 0, %s114
      %s117 = sphi 0, %s116
      %s131 = sphi 0, %s117
      %s137 = sphi 0, %s139
      %s140 = sphi 0, %s137
      %s141 = sphi 0, %s140
      %s157 = sphi 0, %s141
    $region4: #{tpu_custom_call.1} parent=1 // loop_header_branch
      %20 = sbr.rel (%p18) target = $region8
    $region5: #{tpu_custom_call.1} parent=1 // loop_body
      %s22 = ssub.s32 %s17, 1
      %s23 = ssub.s32 %s17, 2
      %s24 = sadd.s32 %s17, 1
      %s25 = ssub.s32 %s17, %s24
      %p26 = scmp.eq.s32.totalorder %s25, 0
      %s28 = sadd.s32 %s27, 1
      %s29 = scalar_select %p26, %s27, %s28
      %p32 = pneg %p26
      %p33 = scmp.eq.s32.totalorder %s17, 1
      %p34 = por %p32, %p33
      %p35 = scmp.ne.s32.totalorder %s27, %s30
      %p36 = scmp.eq.s32.totalorder %s17, 0
      %p37 = por %p35, %p36
      %p38 = scmp.ne.s32.totalorder %s27, %s30
      %p39 = scmp.eq.s32.totalorder %s22, 1
      %p40 = por %p38, %p39
      %p41 = scmp.ne.s32.totalorder %s30, %s31
      %p42 = scmp.eq.s32.totalorder %s22, 0
      %p43 = por %p41, %p42
      %p44 = scmp.ne.s32.totalorder %s30, %s31
      %p45 = scmp.eq.s32.totalorder %s23, 1
      %p46 = por %p44, %p45
      %p48 = scmp.ne.s32.totalorder %s31, %s47
      %p49 = scmp.eq.s32.totalorder %s23, 0
      %p50 = por %p48, %p49
      %s52 = sadd.s32 %s51, 1
      %p55 = scmp.eq.s32.totalorder %s17, 1
      %p56 = scmp.ne.s32.totalorder %s51, %s53
      %p57 = scmp.eq.s32.totalorder %s17, 0
      %p58 = por %p56, %p57
      %p59 = scmp.ne.s32.totalorder %s51, %s53
      %p60 = scmp.eq.s32.totalorder %s22, 1
      %p61 = por %p59, %p60
      %p62 = scmp.ne.s32.totalorder %s53, %s54
      %p63 = scmp.eq.s32.totalorder %s22, 0
      %p64 = por %p62, %p63
      %p65 = scmp.ne.s32.totalorder %s53, %s54
      %p66 = scmp.eq.s32.totalorder %s23, 1
      %p67 = por %p65, %p66
      %p69 = scmp.ne.s32.totalorder %s54, %s68
      %p70 = scmp.eq.s32.totalorder %s23, 0
      %p71 = por %p69, %p70
      %s73 = sadd.s32 %s72, 1
      %p76 = scmp.eq.s32.totalorder %s17, 1
      %p77 = scmp.ne.s32.totalorder %s72, %s74
      %p78 = scmp.eq.s32.totalorder %s17, 0
      %p79 = por %p77, %p78
      %p80 = scmp.ne.s32.totalorder %s72, %s74
      %p81 = scmp.eq.s32.totalorder %s22, 1
      %p82 = por %p80, %p81
      %p83 = scmp.ne.s32.totalorder %s74, %s75
      %p84 = scmp.eq.s32.totalorder %s22, 0
      %p85 = por %p83, %p84
      %p86 = scmp.ne.s32.totalorder %s74, %s75
      %p87 = scmp.eq.s32.totalorder %s23, 1
      %p88 = por %p86, %p87
      %p90 = scmp.ne.s32.totalorder %s75, %s89
      %p91 = scmp.eq.s32.totalorder %s23, 0
      %p92 = por %p90, %p91
      %s94 = sadd.s32 %s93, 1
      %p97 = scmp.eq.s32.totalorder %s17, 1
      %p98 = scmp.ne.s32.totalorder %s93, %s95
      %p99 = scmp.eq.s32.totalorder %s17, 0
      %p100 = por %p98, %p99
      %p101 = scmp.ne.s32.totalorder %s93, %s95
      %p102 = scmp.eq.s32.totalorder %s22, 1
      %p103 = por %p101, %p102
      %p104 = scmp.ne.s32.totalorder %s95, %s96
      %p105 = scmp.eq.s32.totalorder %s22, 0
      %p106 = por %p104, %p105
      %p107 = scmp.ne.s32.totalorder %s95, %s96
      %p108 = scmp.eq.s32.totalorder %s23, 1
      %p109 = por %p107, %p108
      %p111 = scmp.ne.s32.totalorder %s96, %s110
      %p112 = scmp.eq.s32.totalorder %s23, 0
      %p113 = por %p111, %p112
      %s115 = sadd.s32 %s114, 1
      %p118 = scmp.eq.s32.totalorder %s17, 1
      %p119 = scmp.ne.s32.totalorder %s114, %s116
      %p120 = scmp.eq.s32.totalorder %s17, 0
      %p121 = por %p119, %p120
      %p122 = scmp.ne.s32.totalorder %s114, %s116
      %p123 = scmp.eq.s32.totalorder %s22, 1
      %p124 = por %p122, %p123
      %p125 = scmp.ne.s32.totalorder %s116, %s117
      %p126 = scmp.eq.s32.totalorder %s22, 0
      %p127 = por %p125, %p126
      %p128 = scmp.ne.s32.totalorder %s116, %s117
      %p129 = scmp.eq.s32.totalorder %s23, 1
      %p130 = por %p128, %p129
      %p132 = scmp.ne.s32.totalorder %s117, %s131
      %p133 = scmp.eq.s32.totalorder %s23, 0
      %p134 = por %p132, %p133
      %s135 = ssub.s32 %s17, %s24
      %p136 = scmp.eq.s32.totalorder %s135, 0
      %s138 = sadd.s32 %s137, 1
      %s139 = scalar_select %p136, %s137, %s138
      %p142 = pneg %p136
      %p143 = scmp.eq.s32.totalorder %s17, 1
      %p144 = por %p142, %p143
      %p145 = scmp.ne.s32.totalorder %s137, %s140
      %p146 = scmp.eq.s32.totalorder %s17, 0
      %p147 = por %p145, %p146
      %p148 = scmp.ne.s32.totalorder %s137, %s140
      %p149 = scmp.eq.s32.totalorder %s22, 1
      %p150 = por %p148, %p149
      %p151 = scmp.ne.s32.totalorder %s140, %s141
      %p152 = scmp.eq.s32.totalorder %s22, 0
      %p153 = por %p151, %p152
      %p154 = scmp.ne.s32.totalorder %s140, %s141
      %p155 = scmp.eq.s32.totalorder %s23, 1
      %p156 = por %p154, %p155
      %p158 = scmp.ne.s32.totalorder %s141, %s157
      %p159 = scmp.eq.s32.totalorder %s23, 0
      %p160 = por %p158, %p159
      %p161 = scmp.le.s32.totalorder 1, %s17
      %p162 = scmp.lt.s32.totalorder %s17, 3
      %p163 = pnand %p161, %p162
      %p164 = pneg %p163
      // Predicated region
      $region9: #{tpu_custom_call.1} parent=5 // pred_check
        _
      $region10: #{tpu_custom_call.1} parent=5 // pred_check_branch
        %166 = sbr.rel (%p163) target = $region12
      $region11: #{tpu_custom_call.1} parent=5 // pred_region
        %s167 = ssub.s32 %s17, 1
        // Predicated region
        $region13: #{tpu_custom_call.1} parent=11 // pred_check
          %p168 = pneg %p64
        $region14: #{tpu_custom_call.1} parent=11 // pred_check_branch
          %170 = sbr.rel (%p168) target = $region16
        $region15: #{tpu_custom_call.1} parent=11 // pred_region
          _
        $region16: #{tpu_custom_call.1} parent=11 // pred_fallthru
          _
        // Predicated region
        $region17: #{tpu_custom_call.1} parent=11 // pred_check
          %p171 = pneg %p85
        $region18: #{tpu_custom_call.1} parent=11 // pred_check_branch
          %173 = sbr.rel (%p171) target = $region20
        $region19: #{tpu_custom_call.1} parent=11 // pred_region
          _
        $region20: #{tpu_custom_call.1} parent=11 // pred_fallthru
          _
        // Predicated region
        $region21: #{tpu_custom_call.1} parent=11 // pred_check
          %p174 = pneg %p106
        $region22: #{tpu_custom_call.1} parent=11 // pred_check_branch
          %176 = sbr.rel (%p174) target = $region24
        $region23: #{tpu_custom_call.1} parent=11 // pred_region
          _
        $region24: #{tpu_custom_call.1} parent=11 // pred_fallthru
          _
        // Predicated region
        $region25: #{tpu_custom_call.1} parent=11 // pred_check
          %p177 = pneg %p127
        $region26: #{tpu_custom_call.1} parent=11 // pred_check_branch
          %179 = sbr.rel (%p177) target = $region28
        $region27: #{tpu_custom_call.1} parent=11 // pred_region
          _
        $region28: #{tpu_custom_call.1} parent=11 // pred_fallthru
          _
      $region12: #{tpu_custom_call.1} parent=5 // pred_fallthru
        _
      %p180 = scmp.lt.s32.totalorder %s17, 2
      // Predicated region
      $region29: #{tpu_custom_call.1} parent=5 // pred_check
        %p181 = pneg %p180
      $region30: #{tpu_custom_call.1} parent=5 // pred_check_branch
        %183 = sbr.rel (%p181) target = $region32
      $region31: #{tpu_custom_call.1} parent=5 // pred_region
        // Predicated region
        $region33: #{tpu_custom_call.1} parent=31 // pred_check
          %p184 = pneg %p37
        $region34: #{tpu_custom_call.1} parent=31 // pred_check_branch
          %186 = sbr.rel (%p184) target = $region36
        $region35: #{tpu_custom_call.1} parent=31 // pred_region
          %s187 = sand.u32 %s27, 1
          %s188 = scalar_lea.sflag [#allocation3], %s187
          %s189 = sand.u32 %s27, 1
          %s190 = smul.addr %s189, 16
          %s191 = scalar_lea.vmem [#allocation2], %s190
          %s193 = ssub.s32 256, 256
          %194 = vsyncadd %s188, %s193
          %s195 = smul.addr %s17, 2
          %s196 = smul.addr %s195, 128
          %s197 = scalar_lea.hbm %s0, %s196
          %s199 = sshll.u32 %s191, 4
          %s200 = int_to_ptr.vmem [resolvable:$true] %s199
          %202 = dma.hbm_to_vmem [thread:$0]  %s197, 256, %s200, %s188
        $region36: #{tpu_custom_call.1} parent=31 // pred_fallthru
          _
      $region32: #{tpu_custom_call.1} parent=5 // pred_fallthru
        _
      %p203 = scmp.le.s32.totalorder 1, %s17
      %p204 = scmp.lt.s32.totalorder %s17, 3
      %p205 = pnand %p203, %p204
      %p206 = pneg %p205
      // Predicated region
      $region37: #{tpu_custom_call.1} parent=5 // pred_check
        _
      $region38: #{tpu_custom_call.1} parent=5 // pred_check_branch
        %208 = sbr.rel (%p205) target = $region40
      $region39: #{tpu_custom_call.1} parent=5 // pred_region
        %s209 = ssub.s32 %s17, 1
        %s210 = sand.u32 %s30, 1
        %s211 = scalar_lea.sflag [#allocation3], %s210
        %s212 = sand.u32 %s30, 1
        %s213 = smul.addr %s212, 16
        %s214 = scalar_lea.vmem [#allocation2], %s213
        // Predicated region
        $region41: #{tpu_custom_call.1} parent=39 // pred_check
          %p215 = pneg %p43
        $region42: #{tpu_custom_call.1} parent=39 // pred_check_branch
          %217 = sbr.rel (%p215) target = $region44
        $region43: #{tpu_custom_call.1} parent=39 // pred_region
          %218 = dma.done %s211, 256
        $region44: #{tpu_custom_call.1} parent=39 // pred_fallthru
          _
        %s219 = sand.u32 %s30, 1
        %s220 = scalar_lea.sflag [#allocation3], %s219
        %s221 = sand.u32 %s30, 1
        %s222 = smul.addr %s221, 16
        %s223 = scalar_lea.vmem [#allocation2], %s222
        %p224 = pneg %p43
        %p225 = pneg %p40
        %p226 = pneg %p64
        %p227 = pneg %p61
        %p228 = pneg %p85
        %p229 = pneg %p82
        %p230 = pneg %p106
        %p231 = pneg %p103
        %p232 = pneg %p127
        %p233 = pneg %p124
        %p234 = pneg %p153
        %p235 = pneg %p150
        %s236 = sand.u32 %s140, 1
        %s237 = scalar_lea.sflag [#allocation4], %s236
        %s238 = sand.u32 %s140, 1
        %s239 = smul.addr %s238, 16
        %s240 = scalar_lea.vmem [#allocation5], %s239
        %v241 = vld [vmem:[%s214] sm:$0xff]
        %v242 = vld [vmem:[%s214 + $0x8] sm:$0xff]
        %v243 = vadd.f32 %v241, %v242
        %244 = vadd.xlane.f32.xlu0 %v243
        %v245 = vpop.xlane.xlu0 %244
        %v246 = vrcp.pop 256.0
        %v247 = vmul.f32 %v245, %v246
        %v248 = vld [vmem:[%s1] sm:$0xff]
        %v249 = vmul.f32 %v248, %v247
        %vm250 = vcmask 15360
        %v251 = vsel %vm250, %v249, 0.0
        %v252 = vrot.slane %v251, 4
        %v253 = vadd.f32 %v251, %v252
        %v254 = vrot.slane %v253, 2
        %v255 = vadd.f32 %v253, %v254
        %v256 = vrot.slane %v255, 1
        %v257 = vadd.f32 %v255, %v256
        %v258 = vld [vmem:[%s2] sm:$0x1]
        %v259 = vadd.f32 %v257, %v258
        %v260 = vmax.f32 %v259, 0.0
        %v261 = vld [vmem:[%s3] sm:$0xff]
        %v262 = vlaneseq
        %v263 = vshrl.u32 %v262, 7
        %v264 = vsub.s32 0, %v263
        %v265 = vrot.slane %v260, %v264
        %v266 = vmul.f32 %v261, %v265
        %v267 = vsel %vm250, %v266, 0.0
        %268 = vadd.xlane.f32.xlu0 %v267
        %v269 = vpop.xlane.xlu0 %268
        %v270 = vld [vmem:[%s4] sm:$0xff]
        %v271 = vadd.f32 %v269, %v270
        %v272 = vxor.u32 %v271, 2147483648
        %v273 = vmul.f32 %v272, 1.442695
        %v274 = vpow.pop %v273
        %v275 = vadd.f32 %v274, 1.0
        %v276 = vrcp.pop %v275
        %v277 = vmul.f32 1.0, %v276
        %279 = vset.pattern.permute.xlu0 0
        %280 = vperm.xlu0 %279, %v277
        %v281 = vpop.permute.xlu0 %280
        %v283 = vmul.f32 %v241, %v281
        %v284 = vmul.f32 %v242, %v281
        %285 = vst [vmem:[%s240] sm:$0xff] %v283
        %286 = vst [vmem:[%s240 + $0x8] sm:$0xff] %v284
        %s287 = sand.u32 %s140, 1
        %s288 = scalar_lea.sflag [#allocation4], %s287
        %s289 = sand.u32 %s140, 1
        %s290 = smul.addr %s289, 16
        %s291 = scalar_lea.vmem [#allocation5], %s290
        // Predicated region
        $region45: #{tpu_custom_call.1} parent=39 // pred_check
          %p292 = pneg %p150
        $region46: #{tpu_custom_call.1} parent=39 // pred_check_branch
          %294 = sbr.rel (%p292) target = $region48
        $region47: #{tpu_custom_call.1} parent=39 // pred_region
          %s296 = ssub.s32 256, 256
          %297 = vsyncadd %s288, %s296
          %s298 = smul.addr %s22, 2
          %s299 = smul.addr %s298, 128
          %s300 = scalar_lea.hbm %s5, %s299
          %s302 = sshll.u32 %s291, 4
          %s303 = int_to_ptr.vmem [resolvable:$true] %s302
          %305 = dma.vmem_to_hbm [thread:$0]  %s303, 256, %s300, %s288
        $region48: #{tpu_custom_call.1} parent=39 // pred_fallthru
          _
      $region40: #{tpu_custom_call.1} parent=5 // pred_fallthru
        _
      %p306 = scmp.le.s32.totalorder 2, %s17
      // Predicated region
      $region49: #{tpu_custom_call.1} parent=5 // pred_check
        %p307 = pneg %p306
      $region50: #{tpu_custom_call.1} parent=5 // pred_check_branch
        %309 = sbr.rel (%p307) target = $region52
      $region51: #{tpu_custom_call.1} parent=5 // pred_region
        %s310 = ssub.s32 %s17, 2
        // Predicated region
        $region53: #{tpu_custom_call.1} parent=51 // pred_check
          %p311 = pneg %p156
        $region54: #{tpu_custom_call.1} parent=51 // pred_check_branch
          %313 = sbr.rel (%p311) target = $region56
        $region55: #{tpu_custom_call.1} parent=51 // pred_region
          %s314 = sand.u32 %s141, 1
          %s315 = scalar_lea.sflag [#allocation4], %s314
          %s316 = sand.u32 %s141, 1
          %s317 = smul.addr %s316, 16
          %s318 = scalar_lea.vmem [#allocation5], %s317
          %319 = dma.done %s315, 256
        $region56: #{tpu_custom_call.1} parent=51 // pred_fallthru
          _
      $region52: #{tpu_custom_call.1} parent=5 // pred_fallthru
        _
    $region6: #{tpu_custom_call.1} parent=1 // loop_footer
      %s21 = sadd.s32 1, %s17
    $region7: #{tpu_custom_call.1} parent=1 // loop_footer_branch
      %16 = sbr.rel target = $region3
    $region8: #{tpu_custom_call.1} parent=1 // loop_exit
      _
    %320 = vsyncpa [#allocation3], 1
    %s321 = scalar_lea.sflag [#allocation3], 1
    %322 = vsyncpa %s321, 1
    %323 = vsyncpa [#allocation4], 1
    %s324 = scalar_lea.sflag [#allocation4], 1
    %325 = vsyncpa %s324, 1

</llo_original>
